<compile_context>
chip_gen: v7x
topology: tpu7x:2x2x1
jax: 0.10.0
libtpu: 0.0.40
codegen_flags: <defaults>
</compile_context>

<pallas_src>
import jax
import jax.numpy as jnp
from jax.experimental import pallas as pl
from jax.experimental.pallas import tpu as pltpu

GNN_HIDDEN = 768
BERT_HIDDEN = 768
EMBED_DIM = 768
NUM_HEADS = 4
HEAD_DIM = EMBED_DIM // NUM_HEADS              # 192
HPAD = 8                                       # head axis padded to 8
NUM_LAYERS = 5                                 # GraphCNN num_layers -> 5 embeddings
GRAPH_INPUT_DIM = 302                          # graph_fc: Linear(302, 768)
GRAPH_INPUT_PAD = 384                          # K padded to a lane-friendly size
YM_SELECT_SUB_NUM = 4                          # graph tokens per chunk
NUM_CLASSES = 2
CLS_PAD = 128                                  # lane-dense classifier output slab
LN_EPS = 1e-5


# ---------------------------------------------------------------------------
# Kernel 1: graph_fc projection of the layer-0 graph embeddings (N,302)->(N,768)
# bf16 operands (f32 accumulation), K padded 302->384, row-tiled grid.
# ---------------------------------------------------------------------------
def _graph_fc_kernel(x_ref, w_ref, b_ref, o_ref):
    o_ref[...] = (
        jnp.dot(x_ref[...], w_ref[...], preferred_element_type=jnp.float32)
        + b_ref[...]
    )


def graph_fc(x, w, b, *, row_block=256):
    n, k_in = x.shape
    d = EMBED_DIM
    rb = min(row_block, max(8, ((n + 7) // 8) * 8))
    n_pad = ((n + rb - 1) // rb) * rb
    x_p = jnp.zeros((n_pad, GRAPH_INPUT_PAD), jnp.bfloat16)
    x_p = x_p.at[:n, :k_in].set(x.astype(jnp.bfloat16))
    w_p = jnp.zeros((GRAPH_INPUT_PAD, d), jnp.bfloat16)
    w_p = w_p.at[:k_in, :].set(w.astype(jnp.bfloat16))
    out = pl.pallas_call(
        _graph_fc_kernel,
        grid=(n_pad // rb,),
        in_specs=[
            pl.BlockSpec((rb, GRAPH_INPUT_PAD), lambda i: (i, 0)),
            pl.BlockSpec((GRAPH_INPUT_PAD, d), lambda i: (0, 0)),
            pl.BlockSpec((1, d), lambda i: (0, 0)),
        ],
        out_specs=pl.BlockSpec((rb, d), lambda i: (i, 0)),
        out_shape=jax.ShapeDtypeStruct((n_pad, d), jnp.float32),
        compiler_params=pltpu.CompilerParams(
            dimension_semantics=("parallel",)),
    )(x_p, w_p, b)
    return out[:n]


# ---------------------------------------------------------------------------
# Kernel 2: fused BiAttentionBlock + token mean pool + fused_fc + classifier.
#
# Per grid step (R = chunk_block chunks):
#   v_ref : (5, R*4, 768) bf16   graph rows, layer-major, (chunk, token) inside
#   l_ref : (R, 768)      f32    one text embedding per chunk
#   out   : (R, 128)      f32    logits, lanes >= NUM_CLASSES are zero padding
#
# Because every text token of a chunk is the same vector:
#   * the graph->text softmax is uniform, so that attention output is exactly
#     value_l (one row per chunk); that whole path (value_l proj, out_v proj,
#     gamma_v, fw weighting) is pre-folded into the classifier weights and is
#     represented by the ln(l) column block of the final matmul;
#   * k is computed from a single row per chunk.
# ---------------------------------------------------------------------------
def _biattn_fused_kernel(v_ref, l_ref, ln_ref, w_qvv_ref, b_qvv_ref,
                         w_k_ref, b_k_ref, hdn_ref, hup_ref, fw_ref,
                         cls_w_ref, cls_b_ref, out_ref):
    f32, bf16 = jnp.float32, jnp.bfloat16
    L, T, D = NUM_LAYERS, YM_SELECT_SUB_NUM, EMBED_DIM

    l_raw = l_ref[...]                              # (R, D) f32
    R = l_raw.shape[0]
    v = v_ref[...].astype(f32)                      # (L, R*T, D), streamed bf16
    LR = L * R
    LRT = LR * T

    ln = ln_ref[...]                                # (4, D): lnv_g, lnv_b, lnl_g, lnl_b

    def layernorm(x, g, b):
        mu = jnp.mean(x, axis=-1, keepdims=True)
        var = jnp.mean((x - mu) ** 2, axis=-1, keepdims=True)
        return (x - mu) * jax.lax.rsqrt(var + LN_EPS) * g + b

    v2 = v.reshape(LRT, D)
    vn = layernorm(v2, ln[0:1, :], ln[1:2, :])          # (L*R*T, D)
    lnl = layernorm(l_raw, ln[2:3, :], ln[3:4, :])      # (R, D)

    # Fused q|value_v projection (q-scale folded in). Text side only needs k;
    # value_l is folded into the classifier weights.
    qvv = jnp.dot(vn.astype(bf16), w_qvv_ref[...],
                  preferred_element_type=f32) + b_qvv_ref[...]       # (LRT, 2D)
    q, vv = qvv[:, :D], qvv[:, D:]
    k = jnp.dot(lnl.astype(bf16), w_k_ref[...],
                preferred_element_type=f32) + b_k_ref[...]           # (R, D)

    # Per-head logits via a 0/1 head-membership matmul (bf16, single MXU pass).
    q3 = q.reshape(LR, T, D)
    k_lr = jnp.broadcast_to(k[None, :, :], (L, R, D)).reshape(LR, D)
    prod = (q3 * k_lr[:, None, :]).reshape(LRT, D)
    logits = jnp.dot(prod.astype(bf16), hdn_ref[...],
                     preferred_element_type=f32)                     # (LRT, HPAD)

    # text->graph softmax over the 4 graph tokens per (layer, chunk, head).
    a = jax.nn.softmax(logits.reshape(LR, T, HPAD), axis=1)
    a_w = jnp.dot(a.reshape(LRT, HPAD).astype(bf16), hup_ref[...],
                  preferred_element_type=f32)                        # (LRT, D)
    out_l = jnp.sum((a_w * vv).reshape(LR, T, D), axis=1)            # (LR, D)

    # fused_fc layer weighting (SMEM scalars) BEFORE the classifier matmul.
    v_mean = jnp.mean(v2.reshape(LR, T, D), axis=1)                  # (LR, D)
    v_mean3 = v_mean.reshape(L, R, D)
    out_l3 = out_l.reshape(L, R, D)
    vmean_fw = fw_ref[0] * v_mean3[0]
    outl_fw = fw_ref[0] * out_l3[0]
    for i in range(1, L):
        vmean_fw = vmean_fw + fw_ref[i] * v_mean3[i]
        outl_fw = outl_fw + fw_ref[i] * out_l3[i]

    # One wide classifier matmul: out_v/out_l projections, layer-scale gammas,
    # value_l projection, fused_fc bias and the residual bases are all folded
    # into cls_w / cls_b (done once in prepare_kernel_params).
    feats = jnp.concatenate([vmean_fw, lnl, l_raw, outl_fw], axis=-1)  # (R, 4D)
    out_ref[...] = (
        jnp.dot(feats.astype(bf16), cls_w_ref[...], preferred_element_type=f32)
        + cls_b_ref[...]
    )


def fused_biattention_head(v_stack, text_vecs, kp, *, chunk_block=16):
    """One pallas_call: BiAttention + pooling + fused_fc + classifier.

    v_stack:   (5, C*4, 768) bf16 graph rows, layer-major
    text_vecs: (C, 768)      one ConvBERT embedding per chunk
    returns    (C, 2)        logits
    """
    c = text_vecs.shape[0]
    cb = max(8, (min(int(chunk_block), 32) // 8) * 8)     # cap at 32 (v7x VMEM)
    # Keep the grid >= 2 steps when there are enough chunks so that
    # dimension_semantics=("parallel",) can use both TensorCores on v7x.
    half = (((c + 1) // 2) + 7) // 8 * 8
    cb = min(cb, max(8, half))
    c_pad = ((c + cb - 1) // cb) * cb
    if c_pad != c:
        v_stack = jnp.pad(
            v_stack, ((0, 0), (0, (c_pad - c) * YM_SELECT_SUB_NUM), (0, 0)))
        text_vecs = jnp.pad(text_vecs, ((0, c_pad - c), (0, 0)))

    d = EMBED_DIM
    rt = cb * YM_SELECT_SUB_NUM

    def const_spec(shape):
        zeros = (0,) * len(shape)
        return pl.BlockSpec(shape, lambda i, _z=zeros: _z)

    out = pl.pallas_call(
        _biattn_fused_kernel,
        grid=(c_pad // cb,),
        in_specs=[
            pl.BlockSpec((NUM_LAYERS, rt, d), lambda i: (0, i, 0)),  # graph rows (bf16)
            pl.BlockSpec((cb, d), lambda i: (i, 0)),                 # text rows
            const_spec((4, d)),                    # layernorm gammas / betas
            const_spec((d, 2 * d)),                # [Wq*scale | Wvv]        (bf16)
            const_spec((1, 2 * d)),                # fused q|vv bias
            const_spec((d, d)),                    # Wk                      (bf16)
            const_spec((1, d)),                    # k bias
            const_spec((d, HPAD)),                 # head-membership (down)  (bf16)
            const_spec((HPAD, d)),                 # head-membership (up)    (bf16)
            pl.BlockSpec(memory_space=pltpu.MemorySpace.SMEM),   # fused_fc w (5,)
            const_spec((4 * d, CLS_PAD)),          # folded classifier weight (bf16)
            const_spec((1, CLS_PAD)),              # folded classifier bias
        ],
        out_specs=pl.BlockSpec((cb, CLS_PAD), lambda i: (i, 0)),
        out_shape=jax.ShapeDtypeStruct((c_pad, CLS_PAD), jnp.float32),
        compiler_params=pltpu.CompilerParams(
            dimension_semantics=("parallel",),     # independent chunk blocks
            vmem_limit_bytes=48 * 1024 * 1024),    # fits v7x 64 MiB physical VMEM
    )(v_stack, text_vecs, kp['ln'], kp['w_qvv'], kp['b_qvv'], kp['w_k'],
      kp['b_k'], kp['hmask_dn'], kp['hmask_up'], kp['fw'],
      kp['cls_w'], kp['cls_b'])
    return out[:c, :NUM_CLASSES]


# ---------------------------------------------------------------------------
# One-time algebraic folding / packing of parameters (plain JAX).
#
# Per-chunk math of the reference head (all 4 text tokens of a chunk are the
# same vector l, layers indexed by j, fw/fb = fused_fc weight/bias):
#   delta_v      = gamma_v * out_v_proj(value_l_proj(ln(l)))        (layer-indep)
#   delta_l[j]   = gamma_l * out_l_proj(out_l[j])
#   logits = (sum_j fw[j]*(mean_t v[j] + delta_v)) @ cls_w_v
#          + (sum_j fw[j]*(l + delta_l[j]))        @ cls_w_l + cls_b + fb*colsum(cls_w)
# which folds exactly into one matmul over [vmean_fw | ln(l) | l | outl_fw].
# ---------------------------------------------------------------------------
def prepare_kernel_params(params):
    d = EMBED_DIM
    scale = HEAD_DIM ** -0.5

    w_q, w_k, w_vv, w_vl = (params['proj_w'][i] for i in range(4))
    b_q, b_k, b_vv, b_vl = (params['proj_b'][i] for i in range(4))
    w_qvv = jnp.concatenate([w_q * scale, w_vv], axis=1)          # (768, 1536)
    b_qvv = jnp.concatenate([b_q * scale, b_vv]).reshape(1, 2 * d)

    gamma_v, gamma_l = params['gamma'][0], params['gamma'][1]
    w_ov_g = params['out_w'][0] * gamma_v[None, :]
    w_ol_g = params['out_w'][1] * gamma_l[None, :]
    b_ov_g = params['out_b'][0] * gamma_v
    b_ol_g = params['out_b'][1] * gamma_l

    cls_w = params['cls_w']                                       # (1536, 2)
    cls_w_v, cls_w_l = cls_w[:d], cls_w[d:]
    cls_b = params['cls_b'].reshape(-1)
    fw = params['fuse_w'].reshape(-1)                             # (5,)
    fb = params['fuse_b'].reshape(())
    sum_fw = jnp.sum(fw)

    # Folded classifier: feats = [vmean_fw | ln(l) | l_raw | outl_fw]  (R, 3072)
    w_vmean = cls_w_v
    w_lnl = (w_vl @ w_ov_g @ cls_w_v) * sum_fw
    w_lraw = cls_w_l * sum_fw
    w_outl = w_ol_g @ cls_w_l
    wcls = jnp.concatenate([w_vmean, w_lnl, w_lraw, w_outl], axis=0)   # (3072, 2)
    bias = (cls_b
            + fb * jnp.sum(cls_w, axis=0)
            + sum_fw * ((b_vl @ w_ov_g + b_ov_g) @ cls_w_v)
            + sum_fw * (b_ol_g @ cls_w_l))

    wcls_pad = jnp.zeros((4 * d, CLS_PAD), jnp.float32).at[:, :NUM_CLASSES].set(wcls)
    bcls_pad = jnp.zeros((1, CLS_PAD), jnp.float32).at[0, :NUM_CLASSES].set(bias)

    head_id = jnp.arange(d) // HEAD_DIM
    hmask = (head_id[:, None] == jnp.arange(HPAD)[None, :]).astype(jnp.float32)

    return {
        'ln': params['ln'],
        'w_qvv': w_qvv.astype(jnp.bfloat16),
        'b_qvv': b_qvv,
        'w_k': w_k.astype(jnp.bfloat16),
        'b_k': b_k.reshape(1, d),
        'hmask_dn': hmask.astype(jnp.bfloat16),                   # (768, 8)
        'hmask_up': hmask.T.astype(jnp.bfloat16),                 # (8, 768)
        'fw': fw.astype(jnp.float32),                             # (5,) -> SMEM
        'cls_w': wcls_pad.astype(jnp.bfloat16),                   # (3072, 128)
        'cls_b': bcls_pad,                                        # (1, 128)
    }


# ---------------------------------------------------------------------------
# FinalModel.forward (from graph/text embeddings onward)
# ---------------------------------------------------------------------------
def final_model_forward(graph_embeddings, text_embeddings, params, *, chunk_block=16):
    # graph_embeddings[0] = self.graph_fc(graph_embeddings[0])
    g0 = graph_fc(graph_embeddings[0], params['graph_fc_w'], params['graph_fc_b'])
    # (5, N, 768) layer-major bf16 slab — no chunk-major transpose needed.
    graph_stack = jnp.stack([g0] + list(graph_embeddings[1:]), axis=0)
    graph_stack = graph_stack.astype(jnp.bfloat16)

    n = graph_stack.shape[1]
    assert n % YM_SELECT_SUB_NUM == 0
    c = n // YM_SELECT_SUB_NUM
    assert c == text_embeddings.shape[0], "num graphs must equal 4 * text batch"

    # text repeat_interleave(4) + unsqueeze(0).repeat(5,1,1) is a pure broadcast:
    # pass one 768-vector per chunk; the kernel exploits the broadcast structure.
    kp = prepare_kernel_params(params)
    return fused_biattention_head(graph_stack, text_embeddings, kp,
                                  chunk_block=chunk_block)


# ---------------------------------------------------------------------------
# Deterministic parameter init (shapes from FinalModel.__init__)
# ---------------------------------------------------------------------------
def init_params(key):
    ks = jax.random.split(key, 12)

    def lin(k, fan_in, shape):
        return jax.random.normal(k, shape, jnp.float32) / jnp.sqrt(float(fan_in))

    d = EMBED_DIM
    return {
        'graph_fc_w': lin(ks[0], GRAPH_INPUT_DIM, (GRAPH_INPUT_DIM, d)),
        'graph_fc_b': jnp.zeros((1, d), jnp.float32),
        'ln': jnp.stack([jnp.ones(d), jnp.zeros(d),
                         jnp.ones(d), jnp.zeros(d)]).astype(jnp.float32),
        'proj_w': jnp.stack([lin(ks[1 + i], d, (d, d)) for i in range(4)]),
        'proj_b': jnp.zeros((4, d), jnp.float32),
        'out_w': jnp.stack([lin(ks[5 + i], d, (d, d)) for i in range(2)]),
        'out_b': jnp.zeros((2, d), jnp.float32),
        'gamma': jnp.full((2, d), 1e-4, jnp.float32),        # BiAttentionBlock layer scale
        'fuse_w': lin(ks[7], NUM_LAYERS, (1, NUM_LAYERS)),   # Linear(5, 1)
        'fuse_b': jnp.zeros((1, 1), jnp.float32),
        'cls_w': lin(ks[8], GNN_HIDDEN + BERT_HIDDEN,
                     (GNN_HIDDEN + BERT_HIDDEN, NUM_CLASSES)),
        'cls_b': jnp.zeros((1, NUM_CLASSES), jnp.float32),
    }


if __name__ == "__main__":
    key = jax.random.PRNGKey(0)
    kg, kt, kp_key = jax.random.split(key, 3)

    batch_text = 8
    num_graphs = batch_text * YM_SELECT_SUB_NUM            # 32 graphs

    # Synthetic deterministic stand-ins for the GraphCNN / ConvBERT extractors.
    gkeys = jax.random.split(kg, NUM_LAYERS)
    graph_embeddings = [jax.random.normal(gkeys[0], (num_graphs, GRAPH_INPUT_DIM),
                                          jnp.float32)]
    for i in range(1, NUM_LAYERS):
        graph_embeddings.append(
            jax.random.normal(gkeys[i], (num_graphs, GNN_HIDDEN), jnp.float32))
    text_embeddings = jax.random.normal(kt, (batch_text, BERT_HIDDEN), jnp.float32)

    params = init_params(kp_key)

    logits = final_model_forward(graph_embeddings, text_embeddings, params)
    logits = jax.block_until_ready(logits)
    assert logits.shape == (batch_text, NUM_CLASSES), logits.shape
    assert bool(jnp.all(jnp.isfinite(logits)))
    print("KERNEL_OK")
</pallas_src>

<mosaic_0001>
module attributes {stable_mosaic.version = 11 : i64} {
  func.func @_graph_fc_kernel(%arg0: i32, %arg1: memref<32x384xbf16, #tpu.memory_space<vmem>>, %arg2: memref<384x768xbf16, #tpu.memory_space<vmem>>, %arg3: memref<1x768xf32, #tpu.memory_space<vmem>>, %arg4: memref<32x768xf32, #tpu.memory_space<vmem>>) attributes {dimension_semantics = [#tpu.dimension_semantics<parallel>], iteration_bounds = array<i64: 1>, scalar_prefetch = 0 : i64, scratch_operands = 0 : i64, tpu.core_type = #tpu.core_type<tc>, window_params = [{transform_indices = @transform_0, window_bounds = array<i64: 32, 384>}, {pipeline_mode = #tpu.pipeline_mode<synchronous>, transform_indices = @transform_1, window_bounds = array<i64: 384, 768>}, {pipeline_mode = #tpu.pipeline_mode<synchronous>, transform_indices = @transform_2, window_bounds = array<i64: 1, 768>}, {transform_indices = @transform_3, window_bounds = array<i64: 32, 768>}]} {
    %c0 = arith.constant 0 : index
    %c0_0 = arith.constant 0 : index
    %0 = vector.load %arg1[%c0, %c0_0] : memref<32x384xbf16, #tpu.memory_space<vmem>>, vector<32x384xbf16>
    %c0_1 = arith.constant 0 : index
    %c0_2 = arith.constant 0 : index
    %1 = vector.load %arg2[%c0_1, %c0_2] : memref<384x768xbf16, #tpu.memory_space<vmem>>, vector<384x768xbf16>
    %cst = arith.constant dense<0.000000e+00> : vector<32x768xf32>
    %2 = tpu.matmul %0, %1, %cst {dimension_numbers = #tpu.dot_dimension_numbers<[1], [0], [0], [1], [0, 0, 1, 1], [], []>} : vector<32x384xbf16>, vector<384x768xbf16>, vector<32x768xf32> -> vector<32x768xf32>
    %c0_3 = arith.constant 0 : index
    %c0_4 = arith.constant 0 : index
    %3 = vector.load %arg3[%c0_3, %c0_4] : memref<1x768xf32, #tpu.memory_space<vmem>>, vector<1x768xf32>
    %4 = vector.broadcast %3 : vector<1x768xf32> to vector<32x768xf32>
    %5 = arith.addf %2, %4 : vector<32x768xf32>
    %c0_5 = arith.constant 0 : index
    %c0_6 = arith.constant 0 : index
    %6 = vector.load %arg4[%c0_5, %c0_6] : memref<32x768xf32, #tpu.memory_space<vmem>>, vector<32x768xf32>
    tpu.vector_store %arg4[%c0_5, %c0_6], %5 {strides = array<i32>} : memref<32x768xf32, #tpu.memory_space<vmem>>, vector<32x768xf32>,
    return
  }
  func.func @transform_0(%arg0: i32) -> (i32, i32) {
    %c0_i32 = arith.constant 0 : i32
    %c0_i32_0 = arith.constant 0 : i32
    return %arg0, %c0_i32 : i32, i32
  }
  func.func @transform_1(%arg0: i32) -> (i32, i32) {
    %c0_i32 = arith.constant 0 : i32
    %c0_i32_0 = arith.constant 0 : i32
    %c0_i32_1 = arith.constant 0 : i32
    return %c0_i32, %c0_i32_0 : i32, i32
  }
  func.func @transform_2(%arg0: i32) -> (i32, i32) {
    %c0_i32 = arith.constant 0 : i32
    %c0_i32_0 = arith.constant 0 : i32
    %c0_i32_1 = arith.constant 0 : i32
    return %c0_i32, %c0_i32_0 : i32, i32
  }
  func.func @transform_3(%arg0: i32) -> (i32, i32) {
    %c0_i32 = arith.constant 0 : i32
    %c0_i32_0 = arith.constant 0 : i32
    return %arg0, %c0_i32 : i32, i32
  }
}

</mosaic_0001>

<llo_original>
// kernel: tpu_custom_call.1
$region0: #{tpu_custom_call.1}
  #allocation0 [shape = 'u32[]', space=smem, size = 0x4, offset = 0x4, fixed_abs, tag = 'smem constant byte address 0x4 - core index']
  #allocation1 [shape = 'u32[144,128]{1,0:T(1,128)}', space=vmem, size = 0x12000, scoped, tag = 'internal scratch']
  %s0 = inlined_call_operand.hbm [shape: bf16[32,384], index: 0, kind: input, shape index: {}]
  %s1 = inlined_call_operand.hbm [shape: bf16[384,768], index: 1, kind: input, shape index: {}]
  %s2 = inlined_call_operand.vmem [shape: f32[1,768], index: 2, kind: input, shape index: {}]
  %s3 = inlined_call_operand.hbm [shape: f32[32,768], index: 3, kind: output, shape index: {}]
  %s4 = sld [smem:[#allocation0]]
  $region30: #{tpu_custom_call.1} parent=0
    _
  %s6 = ssub.s32 1, %s4
  %s7 = scalar_select 0, %s6, %s4
  $region1: #{tpu_custom_call.1} parent=0
    #allocation2 [shape = 'u8[24576]{0}', space=vmem, size = 0x6000, scoped, tag = 'input window, operand 0, single buffered']
    #allocation3 [shape = 's32[1]{0}', space=sflag, size = 0x4, scoped, tag = 'scoped memory for tpu_custom_call.1']
    #allocation4 [shape = 's32[1]{0}', space=sflag, size = 0x4, scoped, tag = 'scoped memory for tpu_custom_call.1']
    #allocation5 [shape = 'u8[589824]{0}', space=vmem, size = 0x90000, scoped, tag = 'input window, operand 1, single buffered']
    #allocation6 [shape = 's32[1]{0}', space=sflag, size = 0x4, scoped, tag = 'scoped memory for tpu_custom_call.1']
    #allocation7 [shape = 'u8[98304]{0}', space=vmem, size = 0x18000, scoped, tag = 'output window, operand 0, single buffered']
    %8 = vsyncpa [#allocation3], 0
    %9 = vsyncpa [#allocation6], 0
    %10 = vsyncpa [#allocation4], 0
    // Predicated region
    $region2: #{tpu_custom_call.1} parent=1 // pred_check
      _
    $region3: #{tpu_custom_call.1} parent=1 // pred_check_branch
      %12 = sbr.rel (0) target = $region5
    $region4: #{tpu_custom_call.1} parent=1 // pred_region
      %s14 = ssub.s32 768, 768
      %15 = vsyncadd [#allocation3], %s14
      %s16 = sshll.u32 [#allocation2], 4
      %s17 = int_to_ptr.vmem [resolvable:$true] %s16
      %22 = dma.hbm_to_vmem [thread:$0]  %s0, 768, %s17, [#allocation3], 192, 192, 12
    $region5: #{tpu_custom_call.1} parent=1 // pred_fallthru
      _
    // Predicated region
    $region6: #{tpu_custom_call.1} parent=1 // pred_check
      _
    $region7: #{tpu_custom_call.1} parent=1 // pred_check_branch
      %24 = sbr.rel (0) target = $region9
    $region8: #{tpu_custom_call.1} parent=1 // pred_region
      %s26 = ssub.s32 18432, 18432
      %27 = vsyncadd [#allocation6], %s26
      %s28 = sshll.u32 [#allocation5], 4
      %s29 = int_to_ptr.vmem [resolvable:$true] %s28
      %34 = dma.hbm_to_vmem [thread:$0]  %s1, 18432, %s29, [#allocation6], 384, 384, 24
    $region9: #{tpu_custom_call.1} parent=1 // pred_fallthru
      _
    // Predicated region
    $region10: #{tpu_custom_call.1} parent=1 // pred_check
      _
    $region11: #{tpu_custom_call.1} parent=1 // pred_check_branch
      %36 = sbr.rel (0) target = $region13
    $region12: #{tpu_custom_call.1} parent=1 // pred_region
      _
    $region13: #{tpu_custom_call.1} parent=1 // pred_fallthru
      _
    // Predicated region
    $region14: #{tpu_custom_call.1} parent=1 // pred_check
      _
    $region15: #{tpu_custom_call.1} parent=1 // pred_check_branch
      %38 = sbr.rel (0) target = $region17
    $region16: #{tpu_custom_call.1} parent=1 // pred_region
      %39 = dma.done [#allocation3], 768
    $region17: #{tpu_custom_call.1} parent=1 // pred_fallthru
      _
    // Predicated region
    $region18: #{tpu_custom_call.1} parent=1 // pred_check
      _
    $region19: #{tpu_custom_call.1} parent=1 // pred_check_branch
      %41 = sbr.rel (0) target = $region21
    $region20: #{tpu_custom_call.1} parent=1 // pred_region
      %42 = dma.done [#allocation6], 18432
    $region21: #{tpu_custom_call.1} parent=1 // pred_fallthru
      _
    %v44 = vld [vmem:[#allocation2] sm:$0xff]
    %v45 = vld [vmem:[#allocation2 + $0x8] sm:$0xf]
    %v46 = vld [vmem:[#allocation2 + $0xc] sm:$0xff]
    %v47 = vld [vmem:[#allocation2 + $0x14] sm:$0xf]
    %v48 = vld [vmem:[#allocation2 + $0x18] sm:$0xff]
    %v49 = vld [vmem:[#allocation2 + $0x20] sm:$0xf]
    %v50 = vld [vmem:[#allocation2 + $0x24] sm:$0xff]
    %v51 = vld [vmem:[#allocation2 + $0x2c] sm:$0xf]
    %v52 = vld [vmem:[#allocation5] sm:$0xff]
    %v53 = vld [vmem:[#allocation5 + $0x8] sm:$0xff]
    %v54 = vld [vmem:[#allocation5 + $0x10] sm:$0xff]
    %v55 = vld [vmem:[#allocation5 + $0x18] sm:$0xff]
    %v56 = vld [vmem:[#allocation5 + $0x20] sm:$0xff]
    %v57 = vld [vmem:[#allocation5 + $0x28] sm:$0xff]
    %v58 = vld [vmem:[#allocation5 + $0x30] sm:$0xff]
    %v59 = vld [vmem:[#allocation5 + $0x38] sm:$0xff]
    %v60 = vld [vmem:[#allocation5 + $0x40] sm:$0xff]
    %v61 = vld [vmem:[#allocation5 + $0x48] sm:$0xff]
    %v62 = vld [vmem:[#allocation5 + $0x50] sm:$0xff]
    %v63 = vld [vmem:[#allocation5 + $0x58] sm:$0xff]
    %v64 = vld [vmem:[#allocation5 + $0x60] sm:$0xff]
    %v65 = vld [vmem:[#allocation5 + $0x68] sm:$0xff]
    %v66 = vld [vmem:[#allocation5 + $0x70] sm:$0xff]
    %v67 = vld [vmem:[#allocation5 + $0x78] sm:$0xff]
    %v68 = vld [vmem:[#allocation5 + $0x80] sm:$0xff]
    %v69 = vld [vmem:[#allocation5 + $0x88] sm:$0xff]
    %v70 = vld [vmem:[#allocation5 + $0x90] sm:$0xff]
    %v71 = vld [vmem:[#allocation5 + $0x98] sm:$0xff]
    %v72 = vld [vmem:[#allocation5 + $0xa0] sm:$0xff]
    %v73 = vld [vmem:[#allocation5 + $0xa8] sm:$0xff]
    %v74 = vld [vmem:[#allocation5 + $0xb0] sm:$0xff]
    %v75 = vld [vmem:[#allocation5 + $0xb8] sm:$0xff]
    %v76 = vld [vmem:[#allocation5 + $0xc0] sm:$0xff]
    %v77 = vld [vmem:[#allocation5 + $0xc8] sm:$0xff]
    %v78 = vld [vmem:[#allocation5 + $0xd0] sm:$0xff]
    %v79 = vld [vmem:[#allocation5 + $0xd8] sm:$0xff]
    %v80 = vld [vmem:[#allocation5 + $0xe0] sm:$0xff]
    %v81 = vld [vmem:[#allocation5 + $0xe8] sm:$0xff]
    %v82 = vld [vmem:[#allocation5 + $0xf0] sm:$0xff]
    %v83 = vld [vmem:[#allocation5 + $0xf8] sm:$0xff]
    %v84 = vld [vmem:[#allocation5 + $0x100] sm:$0xff]
    %v85 = vld [vmem:[#allocation5 + $0x108] sm:$0xff]
    %v86 = vld [vmem:[#allocation5 + $0x110] sm:$0xff]
    %v87 = vld [vmem:[#allocation5 + $0x118] sm:$0xff]
    %v88 = vld [vmem:[#allocation5 + $0x120] sm:$0xff]
    %v89 = vld [vmem:[#allocation5 + $0x128] sm:$0xff]
    %v90 = vld [vmem:[#allocation5 + $0x130] sm:$0xff]
    %v91 = vld [vmem:[#allocation5 + $0x138] sm:$0xff]
    %v92 = vld [vmem:[#allocation5 + $0x140] sm:$0xff]
    %v93 = vld [vmem:[#allocation5 + $0x148] sm:$0xff]
    %v94 = vld [vmem:[#allocation5 + $0x150] sm:$0xff]
    %v95 = vld [vmem:[#allocation5 + $0x158] sm:$0xff]
    %v96 = vld [vmem:[#allocation5 + $0x160] sm:$0xff]
    %v97 = vld [vmem:[#allocation5 + $0x168] sm:$0xff]
    %v98 = vld [vmem:[#allocation5 + $0x170] sm:$0xff]
    %v99 = vld [vmem:[#allocation5 + $0x178] sm:$0xff]
    %v100 = vld [vmem:[#allocation5 + $0x180] sm:$0xff]
    %v101 = vld [vmem:[#allocation5 + $0x188] sm:$0xff]
    %v102 = vld [vmem:[#allocation5 + $0x190] sm:$0xff]
    %v103 = vld [vmem:[#allocation5 + $0x198] sm:$0xff]
    %v104 = vld [vmem:[#allocation5 + $0x1a0] sm:$0xff]
    %v105 = vld [vmem:[#allocation5 + $0x1a8] sm:$0xff]
    %v106 = vld [vmem:[#allocation5 + $0x1b0] sm:$0xff]
    %v107 = vld [vmem:[#allocation5 + $0x1b8] sm:$0xff]
    %v108 = vld [vmem:[#allocation5 + $0x1c0] sm:$0xff]
    %v109 = vld [vmem:[#allocation5 + $0x1c8] sm:$0xff]
    %v110 = vld [vmem:[#allocation5 + $0x1d0] sm:$0xff]
    %v111 = vld [vmem:[#allocation5 + $0x1d8] sm:$0xff]
    %v112 = vld [vmem:[#allocation5 + $0x1e0] sm:$0xff]
    %v113 = vld [vmem:[#allocation5 + $0x1e8] sm:$0xff]
    %v114 = vld [vmem:[#allocation5 + $0x1f0] sm:$0xff]
    %v115 = vld [vmem:[#allocation5 + $0x1f8] sm:$0xff]
    %v116 = vld [vmem:[#allocation5 + $0x200] sm:$0xff]
    %v117 = vld [vmem:[#allocation5 + $0x208] sm:$0xff]
    %v118 = vld [vmem:[#allocation5 + $0x210] sm:$0xff]
    %v119 = vld [vmem:[#allocation5 + $0x218] sm:$0xff]
    %v120 = vld [vmem:[#allocation5 + $0x220] sm:$0xff]
    %v121 = vld [vmem:[#allocation5 + $0x228] sm:$0xff]
    %v122 = vld [vmem:[#allocation5 + $0x230] sm:$0xff]
    %v123 = vld [vmem:[#allocation5 + $0x238] sm:$0xff]
    %v124 = vld [vmem:[#allocation5 + $0x240] sm:$0xff]
    %v125 = vld [vmem:[#allocation5 + $0x248] sm:$0xff]
    %v126 = vld [vmem:[#allocation5 + $0x250] sm:$0xff]
    %v127 = vld [vmem:[#allocation5 + $0x258] sm:$0xff]
    %v128 = vld [vmem:[#allocation5 + $0x260] sm:$0xff]
    %v129 = vld [vmem:[#allocation5 + $0x268] sm:$0xff]
    %v130 = vld [vmem:[#allocation5 + $0x270] sm:$0xff]
    %v131 = vld [vmem:[#allocation5 + $0x278] sm:$0xff]
    %v132 = vld [vmem:[#allocation5 + $0x280] sm:$0xff]
    %v133 = vld [vmem:[#allocation5 + $0x288] sm:$0xff]
    %v134 = vld [vmem:[#allocation5 + $0x290] sm:$0xff]
    %v135 = vld [vmem:[#allocation5 + $0x298] sm:$0xff]
    %v136 = vld [vmem:[#allocation5 + $0x2a0] sm:$0xff]
    %v137 = vld [vmem:[#allocation5 + $0x2a8] sm:$0xff]
    %v138 = vld [vmem:[#allocation5 + $0x2b0] sm:$0xff]
    %v139 = vld [vmem:[#allocation5 + $0x2b8] sm:$0xff]
    %v140 = vld [vmem:[#allocation5 + $0x2c0] sm:$0xff]
    %v141 = vld [vmem:[#allocation5 + $0x2c8] sm:$0xff]
    %v142 = vld [vmem:[#allocation5 + $0x2d0] sm:$0xff]
    %v143 = vld [vmem:[#allocation5 + $0x2d8] sm:$0xff]
    %v144 = vld [vmem:[#allocation5 + $0x2e0] sm:$0xff]
    %v145 = vld [vmem:[#allocation5 + $0x2e8] sm:$0xff]
    %v146 = vld [vmem:[#allocation5 + $0x2f0] sm:$0xff]
    %v147 = vld [vmem:[#allocation5 + $0x2f8] sm:$0xff]
    %v148 = vld [vmem:[#allocation5 + $0x300] sm:$0xff]
    %v149 = vld [vmem:[#allocation5 + $0x308] sm:$0xff]
    %v150 = vld [vmem:[#allocation5 + $0x310] sm:$0xff]
    %v151 = vld [vmem:[#allocation5 + $0x318] sm:$0xff]
    %v152 = vld [vmem:[#allocation5 + $0x320] sm:$0xff]
    %v153 = vld [vmem:[#allocation5 + $0x328] sm:$0xff]
    %v154 = vld [vmem:[#allocation5 + $0x330] sm:$0xff]
    %v155 = vld [vmem:[#allocation5 + $0x338] sm:$0xff]
    %v156 = vld [vmem:[#allocation5 + $0x340] sm:$0xff]
    %v157 = vld [vmem:[#allocation5 + $0x348] sm:$0xff]
    %v158 = vld [vmem:[#allocation5 + $0x350] sm:$0xff]
    %v159 = vld [vmem:[#allocation5 + $0x358] sm:$0xff]
    %v160 = vld [vmem:[#allocation5 + $0x360] sm:$0xff]
    %v161 = vld [vmem:[#allocation5 + $0x368] sm:$0xff]
    %v162 = vld [vmem:[#allocation5 + $0x370] sm:$0xff]
    %v163 = vld [vmem:[#allocation5 + $0x378] sm:$0xff]
    %v164 = vld [vmem:[#allocation5 + $0x380] sm:$0xff]
    %v165 = vld [vmem:[#allocation5 + $0x388] sm:$0xff]
    %v166 = vld [vmem:[#allocation5 + $0x390] sm:$0xff]
    %v167 = vld [vmem:[#allocation5 + $0x398] sm:$0xff]
    %v168 = vld [vmem:[#allocation5 + $0x3a0] sm:$0xff]
    %v169 = vld [vmem:[#allocation5 + $0x3a8] sm:$0xff]
    %v170 = vld [vmem:[#allocation5 + $0x3b0] sm:$0xff]
    %v171 = vld [vmem:[#allocation5 + $0x3b8] sm:$0xff]
    %v172 = vld [vmem:[#allocation5 + $0x3c0] sm:$0xff]
    %v173 = vld [vmem:[#allocation5 + $0x3c8] sm:$0xff]
    %v174 = vld [vmem:[#allocation5 + $0x3d0] sm:$0xff]
    %v175 = vld [vmem:[#allocation5 + $0x3d8] sm:$0xff]
    %v176 = vld [vmem:[#allocation5 + $0x3e0] sm:$0xff]
    %v177 = vld [vmem:[#allocation5 + $0x3e8] sm:$0xff]
    %v178 = vld [vmem:[#allocation5 + $0x3f0] sm:$0xff]
    %v179 = vld [vmem:[#allocation5 + $0x3f8] sm:$0xff]
    %v180 = vld [vmem:[#allocation5 + $0x400] sm:$0xff]
    %v181 = vld [vmem:[#allocation5 + $0x408] sm:$0xff]
    %v182 = vld [vmem:[#allocation5 + $0x410] sm:$0xff]
    %v183 = vld [vmem:[#allocation5 + $0x418] sm:$0xff]
    %v184 = vld [vmem:[#allocation5 + $0x420] sm:$0xff]
    %v185 = vld [vmem:[#allocation5 + $0x428] sm:$0xff]
    %v186 = vld [vmem:[#allocation5 + $0x430] sm:$0xff]
    %v187 = vld [vmem:[#allocation5 + $0x438] sm:$0xff]
    %v188 = vld [vmem:[#allocation5 + $0x440] sm:$0xff]
    %v189 = vld [vmem:[#allocation5 + $0x448] sm:$0xff]
    %v190 = vld [vmem:[#allocation5 + $0x450] sm:$0xff]
    %v191 = vld [vmem:[#allocation5 + $0x458] sm:$0xff]
    %v192 = vld [vmem:[#allocation5 + $0x460] sm:$0xff]
    %v193 = vld [vmem:[#allocation5 + $0x468] sm:$0xff]
    %v194 = vld [vmem:[#allocation5 + $0x470] sm:$0xff]
    %v195 = vld [vmem:[#allocation5 + $0x478] sm:$0xff]
    %v196 = vld [vmem:[%s2] sm:$0x3f]
    %v198 = vlaneseq
    %v199 = vshrl.u32 %v198, 7
    %v200 = vsub.s32 0, %v199
    %v201 = vrot.slane %v196, %v200
    %v202 = vlaneseq
    %v203 = vshrl.u32 %v202, 7
    %v204 = vsub.s32 1, %v203
    %v205 = vrot.slane %v196, %v204
    %v206 = vlaneseq
    %v207 = vshrl.u32 %v206, 7
    %v208 = vsub.s32 2, %v207
    %v209 = vrot.slane %v196, %v208
    %v210 = vlaneseq
    %v211 = vshrl.u32 %v210, 7
    %v212 = vsub.s32 3, %v211
    %v213 = vrot.slane %v196, %v212
    %v214 = vlaneseq
    %v215 = vshrl.u32 %v214, 7
    %v216 = vsub.s32 4, %v215
    %v217 = vrot.slane %v196, %v216
    %v218 = vlaneseq
    %v219 = vshrl.u32 %v218, 7
    %v220 = vsub.s32 5, %v219
    %v221 = vrot.slane %v196, %v220
    %v236 = vunpack.c.l.b16 %v44
    %v237 = vunpack.c.h.b16 %v44
    %v238 = vunpack.c.l.b16 %v45
    %v239 = vunpack.c.l.b16 %v46
    %v240 = vunpack.c.h.b16 %v46
    %v241 = vunpack.c.l.b16 %v47
    %v242 = vunpack.c.l.b16 %v48
    %v243 = vunpack.c.h.b16 %v48
    %v244 = vunpack.c.l.b16 %v49
    %v245 = vunpack.c.l.b16 %v50
    %v246 = vunpack.c.h.b16 %v50
    %v247 = vunpack.c.l.b16 %v51
    %v248 = vpack.c.b16 %v239, %v236
    %v249 = vpack.c.b16 %v240, %v237
    %v250 = vpack.c.b16 %v241, %v238
    %v251 = vpack.c.b16 %v245, %v242
    %v252 = vpack.c.b16 %v246, %v243
    %v253 = vpack.c.b16 %v247, %v244
    %v404 = vunpack.c.l.b16 %v52
    %v405 = vunpack.c.h.b16 %v52
    %v406 = vunpack.c.l.b16 %v53
    %v407 = vunpack.c.h.b16 %v53
    %v408 = vunpack.c.l.b16 %v54
    %v409 = vunpack.c.h.b16 %v54
    %v410 = vunpack.c.l.b16 %v55
    %v411 = vunpack.c.h.b16 %v55
    %v412 = vunpack.c.l.b16 %v56
    %v413 = vunpack.c.h.b16 %v56
    %v414 = vunpack.c.l.b16 %v57
    %v415 = vunpack.c.h.b16 %v57
    %v416 = vunpack.c.l.b16 %v58
    %v417 = vunpack.c.h.b16 %v58
    %v418 = vunpack.c.l.b16 %v59
    %v419 = vunpack.c.h.b16 %v59
    %v420 = vunpack.c.l.b16 %v60
    %v421 = vunpack.c.h.b16 %v60
    %v422 = vunpack.c.l.b16 %v61
    %v423 = vunpack.c.h.b16 %v61
    %v424 = vunpack.c.l.b16 %v62
    %v425 = vunpack.c.h.b16 %v62
    %v426 = vunpack.c.l.b16 %v63
    %v427 = vunpack.c.h.b16 %v63
    %v428 = vunpack.c.l.b16 %v64
    %v429 = vunpack.c.h.b16 %v64
    %v430 = vunpack.c.l.b16 %v65
    %v431 = vunpack.c.h.b16 %v65
    %v432 = vunpack.c.l.b16 %v66
    %v433 = vunpack.c.h.b16 %v66
    %v434 = vunpack.c.l.b16 %v67
    %v435 = vunpack.c.h.b16 %v67
    %v436 = vunpack.c.l.b16 %v68
    %v437 = vunpack.c.h.b16 %v68
    %v438 = vunpack.c.l.b16 %v69
    %v439 = vunpack.c.h.b16 %v69
    %v440 = vunpack.c.l.b16 %v70
    %v441 = vunpack.c.h.b16 %v70
    %v442 = vunpack.c.l.b16 %v71
    %v443 = vunpack.c.h.b16 %v71
    %v444 = vunpack.c.l.b16 %v72
    %v445 = vunpack.c.h.b16 %v72
    %v446 = vunpack.c.l.b16 %v73
    %v447 = vunpack.c.h.b16 %v73
    %v448 = vunpack.c.l.b16 %v74
    %v449 = vunpack.c.h.b16 %v74
    %v450 = vunpack.c.l.b16 %v75
    %v451 = vunpack.c.h.b16 %v75
    %v452 = vunpack.c.l.b16 %v76
    %v453 = vunpack.c.h.b16 %v76
    %v454 = vunpack.c.l.b16 %v77
    %v455 = vunpack.c.h.b16 %v77
    %v456 = vunpack.c.l.b16 %v78
    %v457 = vunpack.c.h.b16 %v78
    %v458 = vunpack.c.l.b16 %v79
    %v459 = vunpack.c.h.b16 %v79
    %v460 = vunpack.c.l.b16 %v80
    %v461 = vunpack.c.h.b16 %v80
    %v462 = vunpack.c.l.b16 %v81
    %v463 = vunpack.c.h.b16 %v81
    %v464 = vunpack.c.l.b16 %v82
    %v465 = vunpack.c.h.b16 %v82
    %v466 = vunpack.c.l.b16 %v83
    %v467 = vunpack.c.h.b16 %v83
    %v468 = vunpack.c.l.b16 %v84
    %v469 = vunpack.c.h.b16 %v84
    %v470 = vunpack.c.l.b16 %v85
    %v471 = vunpack.c.h.b16 %v85
    %v472 = vunpack.c.l.b16 %v86
    %v473 = vunpack.c.h.b16 %v86
    %v474 = vunpack.c.l.b16 %v87
    %v475 = vunpack.c.h.b16 %v87
    %v476 = vunpack.c.l.b16 %v88
    %v477 = vunpack.c.h.b16 %v88
    %v478 = vunpack.c.l.b16 %v89
    %v479 = vunpack.c.h.b16 %v89
    %v480 = vunpack.c.l.b16 %v90
    %v481 = vunpack.c.h.b16 %v90
    %v482 = vunpack.c.l.b16 %v91
    %v483 = vunpack.c.h.b16 %v91
    %v484 = vunpack.c.l.b16 %v92
    %v485 = vunpack.c.h.b16 %v92
    %v486 = vunpack.c.l.b16 %v93
    %v487 = vunpack.c.h.b16 %v93
    %v488 = vunpack.c.l.b16 %v94
    %v489 = vunpack.c.h.b16 %v94
    %v490 = vunpack.c.l.b16 %v95
    %v491 = vunpack.c.h.b16 %v95
    %v492 = vunpack.c.l.b16 %v96
    %v493 = vunpack.c.h.b16 %v96
    %v494 = vunpack.c.l.b16 %v97
    %v495 = vunpack.c.h.b16 %v97
    %v496 = vunpack.c.l.b16 %v98
    %v497 = vunpack.c.h.b16 %v98
    %v498 = vunpack.c.l.b16 %v99
    %v499 = vunpack.c.h.b16 %v99
    %v500 = vunpack.c.l.b16 %v100
    %v501 = vunpack.c.h.b16 %v100
    %v502 = vunpack.c.l.b16 %v101
    %v503 = vunpack.c.h.b16 %v101
    %v504 = vunpack.c.l.b16 %v102
    %v505 = vunpack.c.h.b16 %v102
    %v506 = vunpack.c.l.b16 %v103
    %v507 = vunpack.c.h.b16 %v103
    %v508 = vunpack.c.l.b16 %v104
    %v509 = vunpack.c.h.b16 %v104
    %v510 = vunpack.c.l.b16 %v105
    %v511 = vunpack.c.h.b16 %v105
    %v512 = vunpack.c.l.b16 %v106
    %v513 = vunpack.c.h.b16 %v106
    %v514 = vunpack.c.l.b16 %v107
    %v515 = vunpack.c.h.b16 %v107
    %v516 = vunpack.c.l.b16 %v108
    %v517 = vunpack.c.h.b16 %v108
    %v518 = vunpack.c.l.b16 %v109
    %v519 = vunpack.c.h.b16 %v109
    %v520 = vunpack.c.l.b16 %v110
    %v521 = vunpack.c.h.b16 %v110
    %v522 = vunpack.c.l.b16 %v111
    %v523 = vunpack.c.h.b16 %v111
    %v524 = vunpack.c.l.b16 %v112
    %v525 = vunpack.c.h.b16 %v112
    %v526 = vunpack.c.l.b16 %v113
    %v527 = vunpack.c.h.b16 %v113
    %v528 = vunpack.c.l.b16 %v114
    %v529 = vunpack.c.h.b16 %v114
    %v530 = vunpack.c.l.b16 %v115
    %v531 = vunpack.c.h.b16 %v115
    %v532 = vunpack.c.l.b16 %v116
    %v533 = vunpack.c.h.b16 %v116
    %v534 = vunpack.c.l.b16 %v117
    %v535 = vunpack.c.h.b16 %v117
    %v536 = vunpack.c.l.b16 %v118
    %v537 = vunpack.c.h.b16 %v118
    %v538 = vunpack.c.l.b16 %v119
    %v539 = vunpack.c.h.b16 %v119
    %v540 = vunpack.c.l.b16 %v120
    %v541 = vunpack.c.h.b16 %v120
    %v542 = vunpack.c.l.b16 %v121
    %v543 = vunpack.c.h.b16 %v121
    %v544 = vunpack.c.l.b16 %v122
    %v545 = vunpack.c.h.b16 %v122
    %v546 = vunpack.c.l.b16 %v123
    %v547 = vunpack.c.h.b16 %v123
    %v548 = vunpack.c.l.b16 %v124
    %v549 = vunpack.c.h.b16 %v124
    %v550 = vunpack.c.l.b16 %v125
    %v551 = vunpack.c.h.b16 %v125
    %v552 = vunpack.c.l.b16 %v126
    %v553 = vunpack.c.h.b16 %v126
    %v554 = vunpack.c.l.b16 %v127
    %v555 = vunpack.c.h.b16 %v127
    %v556 = vunpack.c.l.b16 %v128
    %v557 = vunpack.c.h.b16 %v128
    %v558 = vunpack.c.l.b16 %v129
    %v559 = vunpack.c.h.b16 %v129
    %v560 = vunpack.c.l.b16 %v130
    %v561 = vunpack.c.h.b16 %v130
    %v562 = vunpack.c.l.b16 %v131
    %v563 = vunpack.c.h.b16 %v131
    %v564 = vunpack.c.l.b16 %v132
    %v565 = vunpack.c.h.b16 %v132
    %v566 = vunpack.c.l.b16 %v133
    %v567 = vunpack.c.h.b16 %v133
    %v568 = vunpack.c.l.b16 %v134
    %v569 = vunpack.c.h.b16 %v134
    %v570 = vunpack.c.l.b16 %v135
    %v571 = vunpack.c.h.b16 %v135
    %v572 = vunpack.c.l.b16 %v136
    %v573 = vunpack.c.h.b16 %v136
    %v574 = vunpack.c.l.b16 %v137
    %v575 = vunpack.c.h.b16 %v137
    %v576 = vunpack.c.l.b16 %v138
    %v577 = vunpack.c.h.b16 %v138
    %v578 = vunpack.c.l.b16 %v139
    %v579 = vunpack.c.h.b16 %v139
    %v580 = vunpack.c.l.b16 %v140
    %v581 = vunpack.c.h.b16 %v140
    %v582 = vunpack.c.l.b16 %v141
    %v583 = vunpack.c.h.b16 %v141
    %v584 = vunpack.c.l.b16 %v142
    %v585 = vunpack.c.h.b16 %v142
    %v586 = vunpack.c.l.b16 %v143
    %v587 = vunpack.c.h.b16 %v143
    %v588 = vunpack.c.l.b16 %v144
    %v589 = vunpack.c.h.b16 %v144
    %v590 = vunpack.c.l.b16 %v145
    %v591 = vunpack.c.h.b16 %v145
    %v592 = vunpack.c.l.b16 %v146
    %v593 = vunpack.c.h.b16 %v146
    %v594 = vunpack.c.l.b16 %v147
    %v595 = vunpack.c.h.b16 %v147
    %v596 = vunpack.c.l.b16 %v148
    %v597 = vunpack.c.h.b16 %v148
    %v598 = vunpack.c.l.b16 %v149
    %v599 = vunpack.c.h.b16 %v149
    %v600 = vunpack.c.l.b16 %v150
    %v601 = vunpack.c.h.b16 %v150
    %v602 = vunpack.c.l.b16 %v151
    %v603 = vunpack.c.h.b16 %v151
    %v604 = vunpack.c.l.b16 %v152
    %v605 = vunpack.c.h.b16 %v152
    %v606 = vunpack.c.l.b16 %v153
    %v607 = vunpack.c.h.b16 %v153
    %v608 = vunpack.c.l.b16 %v154
    %v609 = vunpack.c.h.b16 %v154
    %v610 = vunpack.c.l.b16 %v155
    %v611 = vunpack.c.h.b16 %v155
    %v612 = vunpack.c.l.b16 %v156
    %v613 = vunpack.c.h.b16 %v156
    %v614 = vunpack.c.l.b16 %v157
    %v615 = vunpack.c.h.b16 %v157
    %v616 = vunpack.c.l.b16 %v158
    %v617 = vunpack.c.h.b16 %v158
    %v618 = vunpack.c.l.b16 %v159
    %v619 = vunpack.c.h.b16 %v159
    %v620 = vunpack.c.l.b16 %v160
    %v621 = vunpack.c.h.b16 %v160
    %v622 = vunpack.c.l.b16 %v161
    %v623 = vunpack.c.h.b16 %v161
    %v624 = vunpack.c.l.b16 %v162
    %v625 = vunpack.c.h.b16 %v162
    %v626 = vunpack.c.l.b16 %v163
    %v627 = vunpack.c.h.b16 %v163
    %v628 = vunpack.c.l.b16 %v164
    %v629 = vunpack.c.h.b16 %v164
    %v630 = vunpack.c.l.b16 %v165
    %v631 = vunpack.c.h.b16 %v165
    %v632 = vunpack.c.l.b16 %v166
    %v633 = vunpack.c.h.b16 %v166
    %v634 = vunpack.c.l.b16 %v167
    %v635 = vunpack.c.h.b16 %v167
    %v636 = vunpack.c.l.b16 %v168
    %v637 = vunpack.c.h.b16 %v168
    %v638 = vunpack.c.l.b16 %v169
    %v639 = vunpack.c.h.b16 %v169
    %v640 = vunpack.c.l.b16 %v170
    %v641 = vunpack.c.h.b16 %v170
    %v642 = vunpack.c.l.b16 %v171
    %v643 = vunpack.c.h.b16 %v171
    %v644 = vunpack.c.l.b16 %v172
    %v645 = vunpack.c.h.b16 %v172
    %v646 = vunpack.c.l.b16 %v173
    %v647 = vunpack.c.h.b16 %v173
    %v648 = vunpack.c.l.b16 %v174
    %v649 = vunpack.c.h.b16 %v174
    %v650 = vunpack.c.l.b16 %v175
    %v651 = vunpack.c.h.b16 %v175
    %v652 = vunpack.c.l.b16 %v176
    %v653 = vunpack.c.h.b16 %v176
    %v654 = vunpack.c.l.b16 %v177
    %v655 = vunpack.c.h.b16 %v177
    %v656 = vunpack.c.l.b16 %v178
    %v657 = vunpack.c.h.b16 %v178
    %v658 = vunpack.c.l.b16 %v179
    %v659 = vunpack.c.h.b16 %v179
    %v660 = vunpack.c.l.b16 %v180
    %v661 = vunpack.c.h.b16 %v180
    %v662 = vunpack.c.l.b16 %v181
    %v663 = vunpack.c.h.b16 %v181
    %v664 = vunpack.c.l.b16 %v182
    %v665 = vunpack.c.h.b16 %v182
    %v666 = vunpack.c.l.b16 %v183
    %v667 = vunpack.c.h.b16 %v183
    %v668 = vunpack.c.l.b16 %v184
    %v669 = vunpack.c.h.b16 %v184
    %v670 = vunpack.c.l.b16 %v185
    %v671 = vunpack.c.h.b16 %v185
    %v672 = vunpack.c.l.b16 %v186
    %v673 = vunpack.c.h.b16 %v186
    %v674 = vunpack.c.l.b16 %v187
    %v675 = vunpack.c.h.b16 %v187
    %v676 = vunpack.c.l.b16 %v188
    %v677 = vunpack.c.h.b16 %v188
    %v678 = vunpack.c.l.b16 %v189
    %v679 = vunpack.c.h.b16 %v189
    %v680 = vunpack.c.l.b16 %v190
    %v681 = vunpack.c.h.b16 %v190
    %v682 = vunpack.c.l.b16 %v191
    %v683 = vunpack.c.h.b16 %v191
    %v684 = vunpack.c.l.b16 %v192
    %v685 = vunpack.c.h.b16 %v192
    %v686 = vunpack.c.l.b16 %v193
    %v687 = vunpack.c.h.b16 %v193
    %v688 = vunpack.c.l.b16 %v194
    %v689 = vunpack.c.h.b16 %v194
    %v690 = vunpack.c.l.b16 %v195
    %v691 = vunpack.c.h.b16 %v195
    %v692 = vpack.c.b16 %v410, %v404
    %v693 = vpack.c.b16 %v411, %v405
    %v694 = vpack.c.b16 %v412, %v406
    %v695 = vpack.c.b16 %v413, %v407
    %v696 = vpack.c.b16 %v414, %v408
    %v697 = vpack.c.b16 %v415, %v409
    %v698 = vpack.c.b16 %v422, %v416
    %v699 = vpack.c.b16 %v423, %v417
    %v700 = vpack.c.b16 %v424, %v418
    %v701 = vpack.c.b16 %v425, %v419
    %v702 = vpack.c.b16 %v426, %v420
    %v703 = vpack.c.b16 %v427, %v421
    %v704 = vpack.c.b16 %v434, %v428
    %v705 = vpack.c.b16 %v435, %v429
    %v706 = vpack.c.b16 %v436, %v430
    %v707 = vpack.c.b16 %v437, %v431
    %v708 = vpack.c.b16 %v438, %v432
    %v709 = vpack.c.b16 %v439, %v433
    %v710 = vpack.c.b16 %v446, %v440
    %v711 = vpack.c.b16 %v447, %v441
    %v712 = vpack.c.b16 %v448, %v442
    %v713 = vpack.c.b16 %v449, %v443
    %v714 = vpack.c.b16 %v450, %v444
    %v715 = vpack.c.b16 %v451, %v445
    %v716 = vpack.c.b16 %v458, %v452
    %v717 = vpack.c.b16 %v459, %v453
    %v718 = vpack.c.b16 %v460, %v454
    %v719 = vpack.c.b16 %v461, %v455
    %v720 = vpack.c.b16 %v462, %v456
    %v721 = vpack.c.b16 %v463, %v457
    %v722 = vpack.c.b16 %v470, %v464
    %v723 = vpack.c.b16 %v471, %v465
    %v724 = vpack.c.b16 %v472, %v466
    %v725 = vpack.c.b16 %v473, %v467
    %v726 = vpack.c.b16 %v474, %v468
    %v727 = vpack.c.b16 %v475, %v469
    %v728 = vpack.c.b16 %v482, %v476
    %v729 = vpack.c.b16 %v483, %v477
    %v730 = vpack.c.b16 %v484, %v478
    %v731 = vpack.c.b16 %v485, %v479
    %v732 = vpack.c.b16 %v486, %v480
    %v733 = vpack.c.b16 %v487, %v481
    %v734 = vpack.c.b16 %v494, %v488
    %v735 = vpack.c.b16 %v495, %v489
    %v736 = vpack.c.b16 %v496, %v490
    %v737 = vpack.c.b16 %v497, %v491
    %v738 = vpack.c.b16 %v498, %v492
    %v739 = vpack.c.b16 %v499, %v493
    %v740 = vpack.c.b16 %v506, %v500
    %v741 = vpack.c.b16 %v507, %v501
    %v742 = vpack.c.b16 %v508, %v502
    %v743 = vpack.c.b16 %v509, %v503
    %v744 = vpack.c.b16 %v510, %v504
    %v745 = vpack.c.b16 %v511, %v505
    %v746 = vpack.c.b16 %v518, %v512
    %v747 = vpack.c.b16 %v519, %v513
    %v748 = vpack.c.b16 %v520, %v514
    %v749 = vpack.c.b16 %v521, %v515
    %v750 = vpack.c.b16 %v522, %v516
    %v751 = vpack.c.b16 %v523, %v517
    %v752 = vpack.c.b16 %v530, %v524
    %v753 = vpack.c.b16 %v531, %v525
    %v754 = vpack.c.b16 %v532, %v526
    %v755 = vpack.c.b16 %v533, %v527
    %v756 = vpack.c.b16 %v534, %v528
    %v757 = vpack.c.b16 %v535, %v529
    %v758 = vpack.c.b16 %v542, %v536
    %v759 = vpack.c.b16 %v543, %v537
    %v760 = vpack.c.b16 %v544, %v538
    %v761 = vpack.c.b16 %v545, %v539
    %v762 = vpack.c.b16 %v546, %v540
    %v763 = vpack.c.b16 %v547, %v541
    %v764 = vpack.c.b16 %v554, %v548
    %v765 = vpack.c.b16 %v555, %v549
    %v766 = vpack.c.b16 %v556, %v550
    %v767 = vpack.c.b16 %v557, %v551
    %v768 = vpack.c.b16 %v558, %v552
    %v769 = vpack.c.b16 %v559, %v553
    %v770 = vpack.c.b16 %v566, %v560
    %v771 = vpack.c.b16 %v567, %v561
    %v772 = vpack.c.b16 %v568, %v562
    %v773 = vpack.c.b16 %v569, %v563
    %v774 = vpack.c.b16 %v570, %v564
    %v775 = vpack.c.b16 %v571, %v565
    %v776 = vpack.c.b16 %v578, %v572
    %v777 = vpack.c.b16 %v579, %v573
    %v778 = vpack.c.b16 %v580, %v574
    %v779 = vpack.c.b16 %v581, %v575
    %v780 = vpack.c.b16 %v582, %v576
    %v781 = vpack.c.b16 %v583, %v577
    %v782 = vpack.c.b16 %v590, %v584
    %v783 = vpack.c.b16 %v591, %v585
    %v784 = vpack.c.b16 %v592, %v586
    %v785 = vpack.c.b16 %v593, %v587
    %v786 = vpack.c.b16 %v594, %v588
    %v787 = vpack.c.b16 %v595, %v589
    %v788 = vpack.c.b16 %v602, %v596
    %v789 = vpack.c.b16 %v603, %v597
    %v790 = vpack.c.b16 %v604, %v598
    %v791 = vpack.c.b16 %v605, %v599
    %v792 = vpack.c.b16 %v606, %v600
    %v793 = vpack.c.b16 %v607, %v601
    %v794 = vpack.c.b16 %v614, %v608
    %v795 = vpack.c.b16 %v615, %v609
    %v796 = vpack.c.b16 %v616, %v610
    %v797 = vpack.c.b16 %v617, %v611
    %v798 = vpack.c.b16 %v618, %v612
    %v799 = vpack.c.b16 %v619, %v613
    %v800 = vpack.c.b16 %v626, %v620
    %v801 = vpack.c.b16 %v627, %v621
    %v802 = vpack.c.b16 %v628, %v622
    %v803 = vpack.c.b16 %v629, %v623
    %v804 = vpack.c.b16 %v630, %v624
    %v805 = vpack.c.b16 %v631, %v625
    %v806 = vpack.c.b16 %v638, %v632
    %v807 = vpack.c.b16 %v639, %v633
    %v808 = vpack.c.b16 %v640, %v634
    %v809 = vpack.c.b16 %v641, %v635
    %v810 = vpack.c.b16 %v642, %v636
    %v811 = vpack.c.b16 %v643, %v637
    %v812 = vpack.c.b16 %v650, %v644
    %v813 = vpack.c.b16 %v651, %v645
    %v814 = vpack.c.b16 %v652, %v646
    %v815 = vpack.c.b16 %v653, %v647
    %v816 = vpack.c.b16 %v654, %v648
    %v817 = vpack.c.b16 %v655, %v649
    %v818 = vpack.c.b16 %v662, %v656
    %v819 = vpack.c.b16 %v663, %v657
    %v820 = vpack.c.b16 %v664, %v658
    %v821 = vpack.c.b16 %v665, %v659
    %v822 = vpack.c.b16 %v666, %v660
    %v823 = vpack.c.b16 %v667, %v661
    %v824 = vpack.c.b16 %v674, %v668
    %v825 = vpack.c.b16 %v675, %v669
    %v826 = vpack.c.b16 %v676, %v670
    %v827 = vpack.c.b16 %v677, %v671
    %v828 = vpack.c.b16 %v678, %v672
    %v829 = vpack.c.b16 %v679, %v673
    %v830 = vpack.c.b16 %v686, %v680
    %v831 = vpack.c.b16 %v687, %v681
    %v832 = vpack.c.b16 %v688, %v682
    %v833 = vpack.c.b16 %v689, %v683
    %v834 = vpack.c.b16 %v690, %v684
    %v835 = vpack.c.b16 %v691, %v685
    %980 = vmatprep.subr.bf16.mxu0 %v693
    %981 = vmatpush1.bf16.msra.mxu0 %v692
    %982 = vmatprep.subr.bf16.mxu0 %v699
    %983 = vmatpush1.bf16.msra.mxu0 %v698
    %984 = vmatprep.subr.bf16.mxu0 %v705
    %985 = vmatpush1.bf16.msra.mxu0 %v704
    %986 = vmatprep.subr.bf16.mxu0 %v711
    %987 = vmatpush1.bf16.msra.mxu0 %v710
    %988 = vmatprep.subr.bf16.mxu0 %v717
    %989 = vmatpush1.bf16.msra.mxu0 %v716
    %990 = vmatprep.subr.bf16.mxu0 %v723
    %991 = vmatpush1.bf16.msra.mxu0 %v722
    %992 = vmatprep.subr.bf16.mxu0 %v729
    %993 = vmatpush1.bf16.msra.mxu0 %v728
    %994 = vmatprep.subr.bf16.mxu0 %v735
    %995 = vmatpush1.bf16.msra.mxu0 %v734
    %996 = vmatprep.subr.bf16.mxu0 %v741
    %997 = vmatpush1.bf16.msra.mxu0 %v740
    %998 = vmatprep.subr.bf16.mxu0 %v747
    %999 = vmatpush1.bf16.msra.mxu0 %v746
    %1000 = vmatprep.subr.bf16.mxu0 %v753
    %1001 = vmatpush1.bf16.msra.mxu0 %v752
    %1002 = vmatprep.subr.bf16.mxu0 %v759
    %1003 = vmatpush1.bf16.msra.mxu0 %v758
    %1004 = vmatprep.subr.bf16.mxu0 %v765
    %1005 = vmatpush1.bf16.msra.mxu0 %v764
    %1006 = vmatprep.subr.bf16.mxu0 %v771
    %1007 = vmatpush1.bf16.msra.mxu0 %v770
    %1008 = vmatprep.subr.bf16.mxu0 %v777
    %1009 = vmatpush1.bf16.msra.mxu0 %v776
    %1010 = vmatprep.subr.bf16.mxu0 %v783
    %1011 = vmatpush1.bf16.msra.mxu0 %v782
    %1012 = vmatprep.mubr.bf16.mxu0 %v249
    %1013 = vmatmul.mubr.bf16.gmra.mrb[0].mxu0 %v248
    %v1014 = vpop.f32.mrb[0].mxu0
    %v1015 = vadd.f32 %v201, %v1014
    %v1016 = vpop.f32.mrb[0].mxu0
    %v1017 = vadd.f32 %v205, %v1016
    %v1018 = vpop.f32.mrb[0].mxu0
    %v1019 = vadd.f32 %v201, %v1018
    %v1020 = vpop.f32.mrb[0].mxu0
    %v1021 = vadd.f32 %v205, %v1020
    %1022 = vmatprep.mubr.bf16.mxu0 %v252
    %1023 = vmatmul.mubr.bf16.gmra.mrb[0].mxu0 %v251
    %v1024 = vpop.f32.mrb[0].mxu0
    %v1025 = vadd.f32 %v201, %v1024
    %v1026 = vpop.f32.mrb[0].mxu0
    %v1027 = vadd.f32 %v205, %v1026
    %v1028 = vpop.f32.mrb[0].mxu0
    %v1029 = vadd.f32 %v201, %v1028
    %v1030 = vpop.f32.mrb[0].mxu0
    %v1031 = vadd.f32 %v205, %v1030
    %1032 = vdwg.mxu0
    %1033 = vmatprep.subr.bf16.mxu0 %v789
    %1034 = vmatpush1.bf16.msra.mxu0 %v788
    %1035 = vmatprep.subr.bf16.mxu0 %v795
    %1036 = vmatpush1.bf16.msra.mxu0 %v794
    %1037 = vmatprep.subr.bf16.mxu0 %v801
    %1038 = vmatpush1.bf16.msra.mxu0 %v800
    %1039 = vmatprep.subr.bf16.mxu0 %v807
    %1040 = vmatpush1.bf16.msra.mxu0 %v806
    %1041 = vmatprep.subr.bf16.mxu0 %v813
    %1042 = vmatpush1.bf16.msra.mxu0 %v812
    %1043 = vmatprep.subr.bf16.mxu0 %v819
    %1044 = vmatpush1.bf16.msra.mxu0 %v818
    %1045 = vmatprep.subr.bf16.mxu0 %v825
    %1046 = vmatpush1.bf16.msra.mxu0 %v824
    %1047 = vmatprep.subr.bf16.mxu0 %v831
    %1048 = vmatpush1.bf16.msra.mxu0 %v830
    %1049 = vmatprep.subr.bf16.mxu0 0
    %1050 = vmatpush1.bf16.msra.mxu0 0
    %1051 = vmatprep.subr.bf16.mxu0 0
    %1052 = vmatpush1.bf16.msra.mxu0 0
    %1053 = vmatprep.subr.bf16.mxu0 0
    %1054 = vmatpush1.bf16.msra.mxu0 0
    %1055 = vmatprep.subr.bf16.mxu0 0
    %1056 = vmatpush1.bf16.msra.mxu0 0
    %1057 = vmatprep.subr.bf16.mxu0 0
    %1058 = vmatpush1.bf16.msra.mxu0 0
    %1059 = vmatprep.subr.bf16.mxu0 0
    %1060 = vmatpush1.bf16.msra.mxu0 0
    %1061 = vmatprep.subr.bf16.mxu0 0
    %1062 = vmatpush1.bf16.msra.mxu0 0
    %1063 = vmatprep.subr.bf16.mxu0 0
    %1064 = vmatpush1.bf16.msra.mxu0 0
    %1065 = vmatprep.mubr.bf16.mxu0 0
    %1066 = vmatmul.mubr.bf16.gmra.mrb[0].mxu0 %v250
    %v1067 = vpop.f32.mrb[0].mxu0
    %v1068 = vadd.f32 %v1015, %v1067
    %v1069 = vpop.f32.mrb[0].mxu0
    %v1070 = vadd.f32 %v1017, %v1069
    %v1071 = vpop.f32.mrb[0].mxu0
    %v1072 = vadd.f32 %v1019, %v1071
    %v1073 = vpop.f32.mrb[0].mxu0
    %v1074 = vadd.f32 %v1021, %v1073
    %1075 = vmatprep.mubr.bf16.mxu0 0
    %1076 = vmatmul.mubr.bf16.gmra.mrb[0].mxu0 %v253
    %v1077 = vpop.f32.mrb[0].mxu0
    %v1078 = vadd.f32 %v1025, %v1077
    %v1079 = vpop.f32.mrb[0].mxu0
    %v1080 = vadd.f32 %v1027, %v1079
    %v1081 = vpop.f32.mrb[0].mxu0
    %v1082 = vadd.f32 %v1029, %v1081
    %v1083 = vpop.f32.mrb[0].mxu0
    %v1084 = vadd.f32 %v1031, %v1083
    %1085 = vdwg.mxu0
    %1086 = vmatprep.subr.bf16.mxu0 %v695
    %1087 = vmatpush1.bf16.msra.mxu0 %v694
    %1088 = vmatprep.subr.bf16.mxu0 %v701
    %1089 = vmatpush1.bf16.msra.mxu0 %v700
    %1090 = vmatprep.subr.bf16.mxu0 %v707
    %1091 = vmatpush1.bf16.msra.mxu0 %v706
    %1092 = vmatprep.subr.bf16.mxu0 %v713
    %1093 = vmatpush1.bf16.msra.mxu0 %v712
    %1094 = vmatprep.subr.bf16.mxu0 %v719
    %1095 = vmatpush1.bf16.msra.mxu0 %v718
    %1096 = vmatprep.subr.bf16.mxu0 %v725
    %1097 = vmatpush1.bf16.msra.mxu0 %v724
    %1098 = vmatprep.subr.bf16.mxu0 %v731
    %1099 = vmatpush1.bf16.msra.mxu0 %v730
    %1100 = vmatprep.subr.bf16.mxu0 %v737
    %1101 = vmatpush1.bf16.msra.mxu0 %v736
    %1102 = vmatprep.subr.bf16.mxu0 %v743
    %1103 = vmatpush1.bf16.msra.mxu0 %v742
    %1104 = vmatprep.subr.bf16.mxu0 %v749
    %1105 = vmatpush1.bf16.msra.mxu0 %v748
    %1106 = vmatprep.subr.bf16.mxu0 %v755
    %1107 = vmatpush1.bf16.msra.mxu0 %v754
    %1108 = vmatprep.subr.bf16.mxu0 %v761
    %1109 = vmatpush1.bf16.msra.mxu0 %v760
    %1110 = vmatprep.subr.bf16.mxu0 %v767
    %1111 = vmatpush1.bf16.msra.mxu0 %v766
    %1112 = vmatprep.subr.bf16.mxu0 %v773
    %1113 = vmatpush1.bf16.msra.mxu0 %v772
    %1114 = vmatprep.subr.bf16.mxu0 %v779
    %1115 = vmatpush1.bf16.msra.mxu0 %v778
    %1116 = vmatprep.subr.bf16.mxu0 %v785
    %1117 = vmatpush1.bf16.msra.mxu0 %v784
    %1118 = vmatprep.mubr.bf16.mxu0 %v249
    %1119 = vmatmul.mubr.bf16.gmra.mrb[0].mxu0 %v248
    %v1120 = vpop.f32.mrb[0].mxu0
    %v1121 = vadd.f32 %v209, %v1120
    %v1122 = vpop.f32.mrb[0].mxu0
    %v1123 = vadd.f32 %v213, %v1122
    %v1124 = vpop.f32.mrb[0].mxu0
    %v1125 = vadd.f32 %v209, %v1124
    %v1126 = vpop.f32.mrb[0].mxu0
    %v1127 = vadd.f32 %v213, %v1126
    %1128 = vmatprep.mubr.bf16.mxu0 %v252
    %1129 = vmatmul.mubr.bf16.gmra.mrb[0].mxu0 %v251
    %v1130 = vpop.f32.mrb[0].mxu0
    %v1131 = vadd.f32 %v209, %v1130
    %v1132 = vpop.f32.mrb[0].mxu0
    %v1133 = vadd.f32 %v213, %v1132
    %v1134 = vpop.f32.mrb[0].mxu0
    %v1135 = vadd.f32 %v209, %v1134
    %v1136 = vpop.f32.mrb[0].mxu0
    %v1137 = vadd.f32 %v213, %v1136
    %1138 = vdwg.mxu0
    %1139 = vmatprep.subr.bf16.mxu0 %v791
    %1140 = vmatpush1.bf16.msra.mxu0 %v790
    %1141 = vmatprep.subr.bf16.mxu0 %v797
    %1142 = vmatpush1.bf16.msra.mxu0 %v796
    %1143 = vmatprep.subr.bf16.mxu0 %v803
    %1144 = vmatpush1.bf16.msra.mxu0 %v802
    %1145 = vmatprep.subr.bf16.mxu0 %v809
    %1146 = vmatpush1.bf16.msra.mxu0 %v808
    %1147 = vmatprep.subr.bf16.mxu0 %v815
    %1148 = vmatpush1.bf16.msra.mxu0 %v814
    %1149 = vmatprep.subr.bf16.mxu0 %v821
    %1150 = vmatpush1.bf16.msra.mxu0 %v820
    %1151 = vmatprep.subr.bf16.mxu0 %v827
    %1152 = vmatpush1.bf16.msra.mxu0 %v826
    %1153 = vmatprep.subr.bf16.mxu0 %v833
    %1154 = vmatpush1.bf16.msra.mxu0 %v832
    %1155 = vmatprep.subr.bf16.mxu0 0
    %1156 = vmatpush1.bf16.msra.mxu0 0
    %1157 = vmatprep.subr.bf16.mxu0 0
    %1158 = vmatpush1.bf16.msra.mxu0 0
    %1159 = vmatprep.subr.bf16.mxu0 0
    %1160 = vmatpush1.bf16.msra.mxu0 0
    %1161 = vmatprep.subr.bf16.mxu0 0
    %1162 = vmatpush1.bf16.msra.mxu0 0
    %1163 = vmatprep.subr.bf16.mxu0 0
    %1164 = vmatpush1.bf16.msra.mxu0 0
    %1165 = vmatprep.subr.bf16.mxu0 0
    %1166 = vmatpush1.bf16.msra.mxu0 0
    %1167 = vmatprep.subr.bf16.mxu0 0
    %1168 = vmatpush1.bf16.msra.mxu0 0
    %1169 = vmatprep.subr.bf16.mxu0 0
    %1170 = vmatpush1.bf16.msra.mxu0 0
    %1171 = vmatprep.mubr.bf16.mxu0 0
    %1172 = vmatmul.mubr.bf16.gmra.mrb[0].mxu0 %v250
    %v1173 = vpop.f32.mrb[0].mxu0
    %v1174 = vadd.f32 %v1121, %v1173
    %v1175 = vpop.f32.mrb[0].mxu0
    %v1176 = vadd.f32 %v1123, %v1175
    %v1177 = vpop.f32.mrb[0].mxu0
    %v1178 = vadd.f32 %v1125, %v1177
    %v1179 = vpop.f32.mrb[0].mxu0
    %v1180 = vadd.f32 %v1127, %v1179
    %1181 = vmatprep.mubr.bf16.mxu0 0
    %1182 = vmatmul.mubr.bf16.gmra.mrb[0].mxu0 %v253
    %v1183 = vpop.f32.mrb[0].mxu0
    %v1184 = vadd.f32 %v1131, %v1183
    %v1185 = vpop.f32.mrb[0].mxu0
    %v1186 = vadd.f32 %v1133, %v1185
    %v1187 = vpop.f32.mrb[0].mxu0
    %v1188 = vadd.f32 %v1135, %v1187
    %v1189 = vpop.f32.mrb[0].mxu0
    %v1190 = vadd.f32 %v1137, %v1189
    %1191 = vdwg.mxu0
    %1192 = vmatprep.subr.bf16.mxu0 %v697
    %1193 = vmatpush1.bf16.msra.mxu0 %v696
    %1194 = vmatprep.subr.bf16.mxu0 %v703
    %1195 = vmatpush1.bf16.msra.mxu0 %v702
    %1196 = vmatprep.subr.bf16.mxu0 %v709
    %1197 = vmatpush1.bf16.msra.mxu0 %v708
    %1198 = vmatprep.subr.bf16.mxu0 %v715
    %1199 = vmatpush1.bf16.msra.mxu0 %v714
    %1200 = vmatprep.subr.bf16.mxu0 %v721
    %1201 = vmatpush1.bf16.msra.mxu0 %v720
    %1202 = vmatprep.subr.bf16.mxu0 %v727
    %1203 = vmatpush1.bf16.msra.mxu0 %v726
    %1204 = vmatprep.subr.bf16.mxu0 %v733
    %1205 = vmatpush1.bf16.msra.mxu0 %v732
    %1206 = vmatprep.subr.bf16.mxu0 %v739
    %1207 = vmatpush1.bf16.msra.mxu0 %v738
    %1208 = vmatprep.subr.bf16.mxu0 %v745
    %1209 = vmatpush1.bf16.msra.mxu0 %v744
    %1210 = vmatprep.subr.bf16.mxu0 %v751
    %1211 = vmatpush1.bf16.msra.mxu0 %v750
    %1212 = vmatprep.subr.bf16.mxu0 %v757
    %1213 = vmatpush1.bf16.msra.mxu0 %v756
    %1214 = vmatprep.subr.bf16.mxu0 %v763
    %1215 = vmatpush1.bf16.msra.mxu0 %v762
    %1216 = vmatprep.subr.bf16.mxu0 %v769
    %1217 = vmatpush1.bf16.msra.mxu0 %v768
    %1218 = vmatprep.subr.bf16.mxu0 %v775
    %1219 = vmatpush1.bf16.msra.mxu0 %v774
    %1220 = vmatprep.subr.bf16.mxu0 %v781
    %1221 = vmatpush1.bf16.msra.mxu0 %v780
    %1222 = vmatprep.subr.bf16.mxu0 %v787
    %1223 = vmatpush1.bf16.msra.mxu0 %v786
    %1224 = vmatprep.mubr.bf16.mxu0 %v249
    %1225 = vmatmul.mubr.bf16.gmra.mrb[0].mxu0 %v248
    %v1226 = vpop.f32.mrb[0].mxu0
    %v1227 = vadd.f32 %v217, %v1226
    %v1228 = vpop.f32.mrb[0].mxu0
    %v1229 = vadd.f32 %v221, %v1228
    %v1230 = vpop.f32.mrb[0].mxu0
    %v1231 = vadd.f32 %v217, %v1230
    %v1232 = vpop.f32.mrb[0].mxu0
    %v1233 = vadd.f32 %v221, %v1232
    %1234 = vmatprep.mubr.bf16.mxu0 %v252
    %1235 = vmatmul.mubr.bf16.gmra.mrb[0].mxu0 %v251
    %v1236 = vpop.f32.mrb[0].mxu0
    %v1237 = vadd.f32 %v217, %v1236
    %v1238 = vpop.f32.mrb[0].mxu0
    %v1239 = vadd.f32 %v221, %v1238
    %v1240 = vpop.f32.mrb[0].mxu0
    %v1241 = vadd.f32 %v217, %v1240
    %v1242 = vpop.f32.mrb[0].mxu0
    %v1243 = vadd.f32 %v221, %v1242
    %1244 = vdwg.mxu0
    %1245 = vmatprep.subr.bf16.mxu0 %v793
    %1246 = vmatpush1.bf16.msra.mxu0 %v792
    %1247 = vmatprep.subr.bf16.mxu0 %v799
    %1248 = vmatpush1.bf16.msra.mxu0 %v798
    %1249 = vmatprep.subr.bf16.mxu0 %v805
    %1250 = vmatpush1.bf16.msra.mxu0 %v804
    %1251 = vmatprep.subr.bf16.mxu0 %v811
    %1252 = vmatpush1.bf16.msra.mxu0 %v810
    %1253 = vmatprep.subr.bf16.mxu0 %v817
    %1254 = vmatpush1.bf16.msra.mxu0 %v816
    %1255 = vmatprep.subr.bf16.mxu0 %v823
    %1256 = vmatpush1.bf16.msra.mxu0 %v822
    %1257 = vmatprep.subr.bf16.mxu0 %v829
    %1258 = vmatpush1.bf16.msra.mxu0 %v828
    %1259 = vmatprep.subr.bf16.mxu0 %v835
    %1260 = vmatpush1.bf16.msra.mxu0 %v834
    %1261 = vmatprep.subr.bf16.mxu0 0
    %1262 = vmatpush1.bf16.msra.mxu0 0
    %1263 = vmatprep.subr.bf16.mxu0 0
    %1264 = vmatpush1.bf16.msra.mxu0 0
    %1265 = vmatprep.subr.bf16.mxu0 0
    %1266 = vmatpush1.bf16.msra.mxu0 0
    %1267 = vmatprep.subr.bf16.mxu0 0
    %1268 = vmatpush1.bf16.msra.mxu0 0
    %1269 = vmatprep.subr.bf16.mxu0 0
    %1270 = vmatpush1.bf16.msra.mxu0 0
    %1271 = vmatprep.subr.bf16.mxu0 0
    %1272 = vmatpush1.bf16.msra.mxu0 0
    %1273 = vmatprep.subr.bf16.mxu0 0
    %1274 = vmatpush1.bf16.msra.mxu0 0
    %1275 = vmatprep.subr.bf16.mxu0 0
    %1276 = vmatpush1.bf16.msra.mxu0 0
    %1277 = vmatprep.mubr.bf16.mxu0 0
    %1278 = vmatmul.mubr.bf16.gmra.mrb[0].mxu0 %v250
    %v1279 = vpop.f32.mrb[0].mxu0
    %v1280 = vadd.f32 %v1227, %v1279
    %v1281 = vpop.f32.mrb[0].mxu0
    %v1282 = vadd.f32 %v1229, %v1281
    %v1283 = vpop.f32.mrb[0].mxu0
    %v1284 = vadd.f32 %v1231, %v1283
    %v1285 = vpop.f32.mrb[0].mxu0
    %v1286 = vadd.f32 %v1233, %v1285
    %1287 = vmatprep.mubr.bf16.mxu0 0
    %1288 = vmatmul.mubr.bf16.gmra.mrb[0].mxu0 %v253
    %v1289 = vpop.f32.mrb[0].mxu0
    %v1290 = vadd.f32 %v1237, %v1289
    %v1291 = vpop.f32.mrb[0].mxu0
    %v1292 = vadd.f32 %v1239, %v1291
    %v1293 = vpop.f32.mrb[0].mxu0
    %v1294 = vadd.f32 %v1241, %v1293
    %v1295 = vpop.f32.mrb[0].mxu0
    %v1296 = vadd.f32 %v1243, %v1295
    %1297 = vdwg.mxu0
    %1298 = vst [vmem:[#allocation7] sm:$0xff] %v1068
    %1299 = vst [vmem:[#allocation7 + $0x8] sm:$0xff] %v1070
    %1300 = vst [vmem:[#allocation7 + $0x10] sm:$0xff] %v1174
    %1301 = vst [vmem:[#allocation7 + $0x18] sm:$0xff] %v1176
    %1302 = vst [vmem:[#allocation7 + $0x20] sm:$0xff] %v1280
    %1303 = vst [vmem:[#allocation7 + $0x28] sm:$0xff] %v1282
    %1304 = vst [vmem:[#allocation7 + $0x30] sm:$0xff] %v1072
    %1305 = vst [vmem:[#allocation7 + $0x38] sm:$0xff] %v1074
    %1306 = vst [vmem:[#allocation7 + $0x40] sm:$0xff] %v1178
    %1307 = vst [vmem:[#allocation7 + $0x48] sm:$0xff] %v1180
    %1308 = vst [vmem:[#allocation7 + $0x50] sm:$0xff] %v1284
    %1309 = vst [vmem:[#allocation7 + $0x58] sm:$0xff] %v1286
    %1310 = vst [vmem:[#allocation7 + $0x60] sm:$0xff] %v1078
    %1311 = vst [vmem:[#allocation7 + $0x68] sm:$0xff] %v1080
    %1312 = vst [vmem:[#allocation7 + $0x70] sm:$0xff] %v1184
    %1313 = vst [vmem:[#allocation7 + $0x78] sm:$0xff] %v1186
    %1314 = vst [vmem:[#allocation7 + $0x80] sm:$0xff] %v1290
    %1315 = vst [vmem:[#allocation7 + $0x88] sm:$0xff] %v1292
    %1316 = vst [vmem:[#allocation7 + $0x90] sm:$0xff] %v1082
    %1317 = vst [vmem:[#allocation7 + $0x98] sm:$0xff] %v1084
    %1318 = vst [vmem:[#allocation7 + $0xa0] sm:$0xff] %v1188
    %1319 = vst [vmem:[#allocation7 + $0xa8] sm:$0xff] %v1190
    %1320 = vst [vmem:[#allocation7 + $0xb0] sm:$0xff] %v1294
    %1321 = vst [vmem:[#allocation7 + $0xb8] sm:$0xff] %v1296
    // Predicated region
    $region22: #{tpu_custom_call.1} parent=1 // pred_check
      _
    $region23: #{tpu_custom_call.1} parent=1 // pred_check_branch
      %1323 = sbr.rel (0) target = $region25
    $region24: #{tpu_custom_call.1} parent=1 // pred_region
      %s1325 = ssub.s32 3072, 3072
      %1326 = vsyncadd [#allocation4], %s1325
      %s1327 = sshll.u32 [#allocation7], 4
      %s1328 = int_to_ptr.vmem [resolvable:$true] %s1327
      %1333 = dma.vmem_to_hbm [thread:$0]  %s1328, 3072, %s3, [#allocation4], 768, 768, 48
    $region25: #{tpu_custom_call.1} parent=1 // pred_fallthru
      _
    // Predicated region
    $region26: #{tpu_custom_call.1} parent=1 // pred_check
      _
    $region27: #{tpu_custom_call.1} parent=1 // pred_check_branch
      %1335 = sbr.rel (0) target = $region29
    $region28: #{tpu_custom_call.1} parent=1 // pred_region
      %1336 = dma.done [#allocation4], 3072
    $region29: #{tpu_custom_call.1} parent=1 // pred_fallthru
      _
    %1337 = vsyncpa [#allocation3], 1
    %1338 = vsyncpa [#allocation6], 1
    %1339 = vsyncpa [#allocation4], 1

</llo_original>
